<compile_context>
chip_gen: v7x
topology: tpu7x:2x2x1
jax: 0.10.0
libtpu: 0.0.40
codegen_flags: <defaults>
</compile_context>

<pallas_src>
import functools
import jax
import jax.numpy as jnp
from jax import lax
from jax.experimental import pallas as pl
from jax.experimental.pallas import tpu as pltpu

F32 = jnp.float32
BF16 = jnp.bfloat16
_VMEM = pl.BlockSpec(memory_space=pltpu.MemorySpace.VMEM)


def _round_up(x, m):
    return ((x + m - 1) // m) * m


# ----------------------------- tiled matmul ---------------------------------

def _mm_kernel(a_ref, b_ref, o_ref, acc_ref):
    @pl.when(pl.program_id(2) == 0)
    def _():
        acc_ref[...] = jnp.zeros_like(acc_ref)

    acc_ref[...] += jnp.dot(a_ref[...], b_ref[...], preferred_element_type=F32)

    @pl.when(pl.program_id(2) == pl.num_programs(2) - 1)
    def _():
        o_ref[...] = acc_ref[...].astype(o_ref.dtype)


def pallas_matmul(a, b, tm=512, tn=512, tk=512, mxu_dtype=BF16):
    """C = A @ B with K-tiled f32 accumulation; inputs cast to bf16 for the MXU."""
    M, K = a.shape
    K2, N = b.shape
    assert K == K2
    tm = min(tm, _round_up(M, 8))
    tk = min(tk, _round_up(K, 128))
    tn = min(tn, _round_up(N, 128))
    Mp, Kp, Np = _round_up(M, tm), _round_up(K, tk), _round_up(N, tn)
    a_p = jnp.pad(a.astype(mxu_dtype), ((0, Mp - M), (0, Kp - K)))
    b_p = jnp.pad(b.astype(mxu_dtype), ((0, Kp - K), (0, Np - N)))
    out = pl.pallas_call(
        _mm_kernel,
        out_shape=jax.ShapeDtypeStruct((Mp, Np), F32),
        grid_spec=pltpu.PrefetchScalarGridSpec(
            num_scalar_prefetch=0,
            grid=(Mp // tm, Np // tn, Kp // tk),
            in_specs=[pl.BlockSpec((tm, tk), lambda i, j, k: (i, k)),
                      pl.BlockSpec((tk, tn), lambda i, j, k: (k, j))],
            out_specs=pl.BlockSpec((tm, tn), lambda i, j, k: (i, j)),
            scratch_shapes=[pltpu.VMEM((tm, tn), F32)]),
        compiler_params=pltpu.CompilerParams(
            dimension_semantics=("parallel", "parallel", "arbitrary"),
            vmem_limit_bytes=48 * 1024 * 1024),
    )(a_p, b_p)
    return out[:M, :N]


# ----------------------------- Gate attention --------------------------------

def _gate_score_kernel(z_ref, w1t_ref, b1_ref, o_ref):
    # z_ref: [K, tn, D]; o_ref: [K, D] column-sum accumulator across the grid.
    @pl.when(pl.program_id(0) == 0)
    def _():
        o_ref[...] = jnp.zeros_like(o_ref)

    k_sem, tn, d = z_ref.shape
    zf = z_ref[...].reshape(k_sem * tn, d)                 # one batched matmul
    h = jnp.tanh(jnp.dot(zf, w1t_ref[...], preferred_element_type=F32)
                 + b1_ref[...])
    o_ref[...] += jnp.sum(h.reshape(k_sem, tn, d), axis=1)


def _gate_combine_kernel(beta_ref, z_ref, o_ref):
    beta = beta_ref[...]                                   # [K, 1]
    z = z_ref[...]                                         # [K, tn, D]
    o_ref[...] = jnp.sum(beta[:, :, None] * z, axis=0)


def pallas_gate(z, w1t, b1, w2t, tn=1024):
    """Gate(z): softmax over K of mean-pooled projection scores, weighted sum."""
    k_sem, n, d = z.shape
    tn_eff = min(tn, _round_up(n, 8))
    n_p = _round_up(n, tn_eff)
    z_p = jnp.pad(z, ((0, 0), (0, n_p - n), (0, 0)))
    grid = (n_p // tn_eff,)

    colsum = pl.pallas_call(
        _gate_score_kernel,
        out_shape=jax.ShapeDtypeStruct((k_sem, d), F32),
        grid_spec=pltpu.PrefetchScalarGridSpec(
            num_scalar_prefetch=0,
            grid=grid,
            in_specs=[pl.BlockSpec((k_sem, tn_eff, d), lambda i: (0, i, 0)),
                      pl.BlockSpec((d, d), lambda i: (0, 0)),
                      pl.BlockSpec((1, d), lambda i: (0, 0))],
            out_specs=pl.BlockSpec((k_sem, d), lambda i: (0, 0))),
        compiler_params=pltpu.CompilerParams(
            dimension_semantics=("arbitrary",)),
    )(z_p, w1t, b1)

    # mean over rows then w2 projection (== projection then mean); softmax
    # over the K scalars (padded rows add an equal shift per k -> cancels).
    scores = jnp.dot(colsum / float(n), w2t)               # [K, 1], tiny glue
    beta = jax.nn.softmax(scores, axis=0)                  # [K, 1]

    out = pl.pallas_call(
        _gate_combine_kernel,
        out_shape=jax.ShapeDtypeStruct((n_p, d), F32),
        grid_spec=pltpu.PrefetchScalarGridSpec(
            num_scalar_prefetch=0,
            grid=grid,
            in_specs=[pl.BlockSpec((k_sem, 1), lambda i: (0, 0)),
                      pl.BlockSpec((k_sem, tn_eff, d), lambda i: (0, i, 0))],
            out_specs=pl.BlockSpec((tn_eff, d), lambda i: (i, 0))),
        compiler_params=pltpu.CompilerParams(
            dimension_semantics=("parallel",)),
    )(beta, z_p)
    return out[:n]


# ----------------------------- losses ----------------------------------------

def _rec_loss_kernel(hu_ref, hi_ref, pe_ref, mask_ref, r1_ref, o_ref, *, neg_weight):
    hu = hu_ref[...]                                       # [B, D]
    hi = hi_ref[...]                                       # [I+1, D]
    r1 = r1_ref[...]                                       # [1, D]
    hur = hu * r1                                          # [B, D]
    # TODO(synk): for large B*L move this contraction onto the MXU (batched
    # dot_general) instead of a VPU broadcast-multiply + lane reduce.
    hpq = jnp.sum(hur[:, None, :] * pe_ref[...], axis=-1) * mask_ref[...]  # [B, L]
    pos_data_loss = jnp.sum((1.0 - neg_weight) * hpq * hpq - 2.0 * hpq)
    part1 = lax.dot_general(hu, hu, (((0,), (0,)), ((), ())),
                            preferred_element_type=F32)    # sum_b outer(hu_b)
    part2 = lax.dot_general(hi, hi, (((0,), (0,)), ((), ())),
                            preferred_element_type=F32)
    s = lax.dot_general(r1, part1 * part2, (((1,), (0,)), ((), ())),
                        preferred_element_type=F32)        # [1, D]
    all_data_loss = jnp.sum(s * r1)                        # sum(p1*p2*(r r^T))
    o_ref[...] = jnp.reshape(neg_weight * all_data_loss + pos_data_loss, (1, 1))


def pallas_rec_loss(h_u, h_i_ext, pos_embs, mask, r1, neg_weight):
    return pl.pallas_call(
        functools.partial(_rec_loss_kernel, neg_weight=neg_weight),
        out_shape=jax.ShapeDtypeStruct((1, 1), F32),
        in_specs=[_VMEM] * 5,
        out_specs=_VMEM,
    )(h_u, h_i_ext, pos_embs, mask, r1)[0, 0]


def _pr_loss_kernel(hu_ref, hi_ref, r1_ref, rating_ref, o_ref):
    hur = hu_ref[...] * r1_ref[...]                        # [B, D]
    hpq = lax.dot_general(hur, hi_ref[...], (((1,), (1,)), ((), ())),
                          preferred_element_type=F32)      # [B, n_item]
    diff = hpq - rating_ref[...]
    o_ref[...] = jnp.reshape(jnp.sum(diff * diff), (1, 1))


def pallas_pr_loss(h_up, h_ip, r1, rating):
    return pl.pallas_call(
        _pr_loss_kernel,
        out_shape=jax.ShapeDtypeStruct((1, 1), F32),
        in_specs=[_VMEM] * 4,
        out_specs=_VMEM,
    )(h_up, h_ip, r1, rating)[0, 0]


def _con_loss_kernel(re_ref, pr_ref, pos_ref, neg_ref, o_ref, prn_ref, *, tau, n_valid):
    tn = re_ref.shape[0]

    @pl.when(pl.program_id(0) == 0)
    def _():
        o_ref[...] = jnp.zeros_like(o_ref)
        pr = pr_ref[...]
        prn_ref[...] = pr / jnp.maximum(
            jnp.sqrt(jnp.sum(pr * pr, axis=-1, keepdims=True)), 1e-12)

    re = re_ref[...]
    re_n = re / jnp.maximum(jnp.sqrt(jnp.sum(re * re, axis=-1, keepdims=True)), 1e-12)
    score = lax.dot_general(re_n, prn_ref[...], (((1,), (1,)), ((), ())),
                            preferred_element_type=F32)    # [tn, N]
    e = jnp.exp(score / tau)
    pos_s = jnp.sum(pos_ref[...] * e, axis=-1, keepdims=True)  # [tn, 1]
    neg_s = jnp.sum(neg_ref[...] * e, axis=-1, keepdims=True)  # [tn, 1]
    row = pl.program_id(0) * tn + lax.broadcasted_iota(jnp.int32, (tn, 1), 0)
    valid = row < n_valid
    pos_s = jnp.where(valid, pos_s, 1.0)                   # padded rows -> log(1)=0
    neg_s = jnp.where(valid, neg_s, 1.0)
    o_ref[...] = o_ref[...] + jnp.reshape(jnp.sum(-jnp.log(pos_s / neg_s)), (1, 1))


def pallas_con_loss(emb_re, emb_pr, pos, neg, tau, tn=256):
    n, d = emb_re.shape
    m = emb_pr.shape[0]
    tn_eff = min(tn, _round_up(n, 8))
    n_p = _round_up(n, tn_eff)
    re_p = jnp.pad(emb_re, ((0, n_p - n), (0, 0)))
    pos_p = jnp.pad(pos, ((0, n_p - n), (0, 0)))
    neg_p = jnp.pad(neg, ((0, n_p - n), (0, 0)))
    out = pl.pallas_call(
        functools.partial(_con_loss_kernel, tau=tau, n_valid=n),
        out_shape=jax.ShapeDtypeStruct((1, 1), F32),
        grid_spec=pltpu.PrefetchScalarGridSpec(
            num_scalar_prefetch=0,
            grid=(n_p // tn_eff,),
            in_specs=[pl.BlockSpec((tn_eff, d), lambda i: (i, 0)),
                      pl.BlockSpec((m, d), lambda i: (0, 0)),
                      pl.BlockSpec((tn_eff, m), lambda i: (i, 0)),
                      pl.BlockSpec((tn_eff, m), lambda i: (i, 0))],
            out_specs=pl.BlockSpec((1, 1), lambda i: (0, 0)),
            scratch_shapes=[pltpu.VMEM((m, d), F32)]),
        compiler_params=pltpu.CompilerParams(
            dimension_semantics=("arbitrary",)),
    )(re_p, emb_pr, pos_p, neg_p)
    return out[0, 0]


# ----------------------------- model glue ------------------------------------

def xavier_uniform(key, shape):
    fan_out, fan_in = shape
    limit = (6.0 / (fan_in + fan_out)) ** 0.5
    return jax.random.uniform(key, shape, F32, -limit, limit)


def make_params(key, n_node, d):
    ks = jax.random.split(key, 8)

    def gate_params(k):
        k1, k2 = jax.random.split(k)
        w1 = xavier_uniform(k1, (d, d))            # nn.Linear(D, D) weight
        b1 = jnp.zeros((1, d), F32)                # bias init = 0
        w2 = xavier_uniform(k2, (1, d))            # nn.Linear(D, 1, bias=False)
        return (w1.T, b1, w2.T)                    # pre-transposed for kernels

    return dict(
        E1=xavier_uniform(ks[0], (n_node, d)),
        E2=xavier_uniform(ks[1], (n_node, d)),
        r_re=jax.random.normal(ks[2], (d, 1), F32),
        r_pr=jax.random.normal(ks[3], (d, 1), F32),
        gate_user_re=gate_params(ks[4]),
        gate_item_re=gate_params(ks[5]),
        gate_user_pr=gate_params(ks[6]),
        gate_item_pr=gate_params(ks[7]),
    )


def dual_forward(nodes, u_iid_list, params, consts):
    n_user = consts["n_user"]
    n_item = consts["n_item"]
    layers = consts["layers"]
    d = consts["d"]

    # conv(): fuse E1/E2 through the shared adjacencies (one wide matmul each)
    e12 = pallas_matmul(consts["feature"],
                        jnp.concatenate([params["E1"], params["E2"]], axis=1))
    g12 = e12
    m12 = e12
    for _ in range(layers):
        g12 = pallas_matmul(consts["graph"], g12)
        m12 = pallas_matmul(consts["mp_graph"], m12)
    in1, in2 = g12[:, :d], g12[:, d:]          # graph conv of E1, E2
    in4, in3 = m12[:, :d], m12[:, d:]          # mp-graph conv of E1, E2

    u1, i1 = in1[:n_user], in1[n_user:]
    u2, i2 = in2[:n_user], in2[n_user:]
    u3, i3 = in3[:n_user], in3[n_user:]
    u4, i4 = in4[:n_user], in4[n_user:]

    # Gate attentions (torch stacks along dim=1 -> [N,K,D]; we use [K,N,D])
    h_user_re = pallas_gate(jnp.stack([u1, u2, u3], 0), *params["gate_user_re"])
    h_item_re = pallas_gate(jnp.stack([i1, i2, i3], 0), *params["gate_item_re"])
    h_user_pr = pallas_gate(jnp.stack([u2, u3, u4], 0), *params["gate_user_pr"])
    h_item_pr = pallas_gate(jnp.stack([i2, i3, i4], 0), *params["gate_item_pr"])

    # rec_loss
    h_u = h_user_re[nodes]
    h_i_ext = jnp.concatenate([h_item_re, jnp.zeros((1, d), F32)], axis=0)
    pos_iids = u_iid_list[nodes]                           # [B, L]
    mask = (pos_iids != n_item).astype(F32)                # [B, L]
    pos_embs = h_i_ext[pos_iids]                           # [B, L, D] gather = glue
    r_re1 = params["r_re"].reshape(1, d)
    loss = pallas_rec_loss(h_u, h_i_ext, pos_embs, mask, r_re1, consts["neg_weight"])

    # pr (MSE) loss
    h_up = h_user_pr[nodes]
    rating = consts["pr_lable"][nodes]
    r_pr1 = params["r_pr"].reshape(1, d)
    loss = loss + consts["pr_w"] * pallas_pr_loss(h_up, h_item_pr, r_pr1, rating)

    # contrastive loss
    emb_re = jnp.concatenate([h_user_re, h_item_re], axis=0)
    emb_pr = jnp.concatenate([h_user_pr, h_item_pr], axis=0)
    loss = loss + consts["con_w"] * pallas_con_loss(
        emb_re, emb_pr, consts["pos"], consts["neg"], consts["tau"])
    return loss


# ----------------------------- main -------------------------------------------

if __name__ == "__main__":
    n_user, n_item = 8, 8
    n_node = n_user + n_item
    d = 32
    L = 8
    layers = 2
    tau = 0.5
    neg_weight = 0.1
    pr_w = 0.01
    con_w = 0.001

    key = jax.random.PRNGKey(0)
    k_dt, k_mp, k_feat, k_par, k_iid = jax.random.split(key, 5)

    data_train = (jax.random.uniform(k_dt, (n_user, n_item)) < 0.4).astype(F32)
    metapath = (jax.random.uniform(k_mp, (n_user, n_item)) < 0.4).astype(F32)
    feature = jax.random.uniform(k_feat, (n_node, n_node), dtype=F32)

    def block_graph(m1, m2):
        top = jnp.concatenate([jnp.eye(n_user, dtype=F32), m1], axis=1)
        bot = jnp.concatenate([m2, jnp.eye(n_item, dtype=F32)], axis=1)
        return jnp.concatenate([top, bot], axis=0)

    def norm_adj(a):
        deg = (a > 0).sum(axis=1).astype(F32) + 1e-7
        dinv = deg ** -0.5
        return dinv[:, None] * a * dinv[None, :]

    graph_raw = block_graph(data_train, data_train.T)
    mp_raw = block_graph(metapath, metapath.T)

    consts = dict(
        n_user=n_user, n_item=n_item, layers=layers, d=d,
        tau=tau, neg_weight=neg_weight, pr_w=pr_w, con_w=con_w,
        feature=feature,
        graph=norm_adj(graph_raw),
        mp_graph=norm_adj((mp_raw > 0).astype(F32)),
        pr_lable=metapath,                                 # [n_user, n_item]
        pos=(mp_raw == 1).astype(F32),                     # [n_node, n_node]
        neg=(mp_raw == 0).astype(F32),
    )

    params = make_params(k_par, n_node, d)

    nodes = jnp.array([0, 1, 2, 3], dtype=jnp.int32)       # batch of user ids
    u_iid_list = jax.random.randint(k_iid, (n_user, L), 0, n_item + 1)  # n_item = pad

    loss = dual_forward(nodes, u_iid_list, params, consts)
    loss = jax.block_until_ready(loss)
    assert jnp.isfinite(loss), f"non-finite loss: {loss}"
    print("KERNEL_OK")
</pallas_src>

<mosaic_0001>
module attributes {stable_mosaic.version = 11 : i64} {
  func.func @_mm_kernel(%arg0: i32, %arg1: i32, %arg2: i32, %arg3: memref<16x128xbf16, #tpu.memory_space<vmem>>, %arg4: memref<128x128xbf16, #tpu.memory_space<vmem>>, %arg5: memref<16x128xf32, #tpu.memory_space<vmem>>, %arg6: memref<16x128xf32, #tpu.memory_space<vmem>>) attributes {dimension_semantics = [#tpu.dimension_semantics<parallel>, #tpu.dimension_semantics<parallel>, #tpu.dimension_semantics<arbitrary>], iteration_bounds = array<i64: 1, 1, 1>, scalar_prefetch = 0 : i64, scratch_operands = 1 : i64, tpu.core_type = #tpu.core_type<tc>, window_params = [{transform_indices = @transform_0, window_bounds = array<i64: 16, 128>}, {transform_indices = @transform_1, window_bounds = array<i64: 128, 128>}, {transform_indices = @transform_2, window_bounds = array<i64: 16, 128>}]} {
    %c0_i32 = arith.constant 0 : i32
    %0 = arith.cmpi eq, %arg2, %c0_i32 : i32
    %1 = arith.extui %0 : i1 to i32
    %c0_i32_0 = arith.constant 0 : i32
    %2 = arith.cmpi ne, %1, %c0_i32_0 : i32
    scf.if %2 {
      %cst_10 = arith.constant 0.000000e+00 : f32
      %12 = vector.broadcast %cst_10 : f32 to vector<16x128xf32>
      %c0_11 = arith.constant 0 : index
      %c0_12 = arith.constant 0 : index
      %13 = vector.load %arg6[%c0_11, %c0_12] : memref<16x128xf32, #tpu.memory_space<vmem>>, vector<16x128xf32>
      tpu.vector_store %arg6[%c0_11, %c0_12], %12 {strides = array<i32>} : memref<16x128xf32, #tpu.memory_space<vmem>>, vector<16x128xf32>,
    } else {
    }
    %c0 = arith.constant 0 : index
    %c0_1 = arith.constant 0 : index
    %3 = vector.load %arg6[%c0, %c0_1] : memref<16x128xf32, #tpu.memory_space<vmem>>, vector<16x128xf32>
    %c0_2 = arith.constant 0 : index
    %c0_3 = arith.constant 0 : index
    %4 = vector.load %arg3[%c0_2, %c0_3] : memref<16x128xbf16, #tpu.memory_space<vmem>>, vector<16x128xbf16>
    %c0_4 = arith.constant 0 : index
    %c0_5 = arith.constant 0 : index
    %5 = vector.load %arg4[%c0_4, %c0_5] : memref<128x128xbf16, #tpu.memory_space<vmem>>, vector<128x128xbf16>
    %cst = arith.constant dense<0.000000e+00> : vector<16x128xf32>
    %6 = tpu.matmul %4, %5, %cst {dimension_numbers = #tpu.dot_dimension_numbers<[1], [0], [0], [1], [0, 0, 1, 1], [], []>} : vector<16x128xbf16>, vector<128x128xbf16>, vector<16x128xf32> -> vector<16x128xf32>
    %7 = arith.addf %3, %6 : vector<16x128xf32>
    %c0_6 = arith.constant 0 : index
    %c0_7 = arith.constant 0 : index
    %8 = vector.load %arg6[%c0_6, %c0_7] : memref<16x128xf32, #tpu.memory_space<vmem>>, vector<16x128xf32>
    tpu.vector_store %arg6[%c0_6, %c0_7], %7 {strides = array<i32>} : memref<16x128xf32, #tpu.memory_space<vmem>>, vector<16x128xf32>,
    %c0_i32_8 = arith.constant 0 : i32
    %9 = arith.cmpi eq, %arg2, %c0_i32_8 : i32
    %10 = arith.extui %9 : i1 to i32
    %c0_i32_9 = arith.constant 0 : i32
    %11 = arith.cmpi ne, %10, %c0_i32_9 : i32
    scf.if %11 {
      %c0_10 = arith.constant 0 : index
      %c0_11 = arith.constant 0 : index
      %12 = vector.load %arg6[%c0_10, %c0_11] : memref<16x128xf32, #tpu.memory_space<vmem>>, vector<16x128xf32>
      %c0_12 = arith.constant 0 : index
      %c0_13 = arith.constant 0 : index
      %13 = vector.load %arg5[%c0_12, %c0_13] : memref<16x128xf32, #tpu.memory_space<vmem>>, vector<16x128xf32>
      tpu.vector_store %arg5[%c0_12, %c0_13], %12 {strides = array<i32>} : memref<16x128xf32, #tpu.memory_space<vmem>>, vector<16x128xf32>,
    } else {
    }
    return
  }
  func.func @transform_0(%arg0: i32, %arg1: i32, %arg2: i32) -> (i32, i32) {
    %c0_i32 = arith.constant 0 : i32
    return %arg0, %arg2 : i32, i32
  }
  func.func @transform_1(%arg0: i32, %arg1: i32, %arg2: i32) -> (i32, i32) {
    %c0_i32 = arith.constant 0 : i32
    return %arg2, %arg1 : i32, i32
  }
  func.func @transform_2(%arg0: i32, %arg1: i32, %arg2: i32) -> (i32, i32) {
    %c0_i32 = arith.constant 0 : i32
    return %arg0, %arg1 : i32, i32
  }
}

</mosaic_0001>

<llo_original>
// kernel: tpu_custom_call.1
$region0: #{tpu_custom_call.1}
  #allocation0 [shape = 'u32[]', space=smem, size = 0x4, offset = 0x4, fixed_abs, tag = 'smem constant byte address 0x4 - core index']
  #allocation1 [shape = 'u32[144,128]{1,0:T(1,128)}', space=vmem, size = 0x12000, scoped, tag = 'internal scratch']
  #allocation2 [shape = 'f32[16,128]{1,0:T(8,128)}', space=vmem, size = 0x2000, scoped, tag = 'scratch operand']
  %s0 = inlined_call_operand.hbm [shape: bf16[16,128], index: 0, kind: input, shape index: {}]
  %s1 = inlined_call_operand.hbm [shape: bf16[128,128], index: 1, kind: input, shape index: {}]
  %s2 = inlined_call_operand.hbm [shape: f32[16,128], index: 2, kind: output, shape index: {}]
  %s3 = sld [smem:[#allocation0]]
  $region34: #{tpu_custom_call.1} parent=0
    _
  %s5 = ssub.s32 1, %s3
  %s6 = scalar_select 0, %s5, %s3
  $region1: #{tpu_custom_call.1} parent=0
    #allocation3 [shape = 'u8[4096]{0}', space=vmem, size = 0x1000, scoped, tag = 'input window, operand 0, single buffered']
    #allocation4 [shape = 's32[1]{0}', space=sflag, size = 0x4, scoped, tag = 'scoped memory for tpu_custom_call.1']
    #allocation5 [shape = 's32[1]{0}', space=sflag, size = 0x4, scoped, tag = 'scoped memory for tpu_custom_call.1']
    #allocation6 [shape = 'u8[32768]{0}', space=vmem, size = 0x8000, scoped, tag = 'input window, operand 1, single buffered']
    #allocation7 [shape = 's32[1]{0}', space=sflag, size = 0x4, scoped, tag = 'scoped memory for tpu_custom_call.1']
    #allocation8 [shape = 'u8[8192]{0}', space=vmem, size = 0x2000, scoped, tag = 'output window, operand 0, single buffered']
    %7 = vsyncpa [#allocation4], 0
    %8 = vsyncpa [#allocation7], 0
    %9 = vsyncpa [#allocation5], 0
    // Predicated region
    $region2: #{tpu_custom_call.1} parent=1 // pred_check
      _
    $region3: #{tpu_custom_call.1} parent=1 // pred_check_branch
      %11 = sbr.rel (0) target = $region5
    $region4: #{tpu_custom_call.1} parent=1 // pred_region
      %s13 = ssub.s32 128, 128
      %14 = vsyncadd [#allocation4], %s13
      %s15 = sshll.u32 [#allocation3], 4
      %s16 = int_to_ptr.vmem [resolvable:$true] %s15
      %21 = dma.hbm_to_vmem [thread:$0]  %s0, 128, %s16, [#allocation4], 64, 64, 4
    $region5: #{tpu_custom_call.1} parent=1 // pred_fallthru
      _
    // Predicated region
    $region6: #{tpu_custom_call.1} parent=1 // pred_check
      _
    $region7: #{tpu_custom_call.1} parent=1 // pred_check_branch
      %23 = sbr.rel (0) target = $region9
    $region8: #{tpu_custom_call.1} parent=1 // pred_region
      %s25 = ssub.s32 1024, 1024
      %26 = vsyncadd [#allocation7], %s25
      %s27 = sshll.u32 [#allocation6], 4
      %s28 = int_to_ptr.vmem [resolvable:$true] %s27
      %33 = dma.hbm_to_vmem [thread:$0]  %s1, 1024, %s28, [#allocation7], 64, 64, 4
    $region9: #{tpu_custom_call.1} parent=1 // pred_fallthru
      _
    // Predicated region
    $region10: #{tpu_custom_call.1} parent=1 // pred_check
      _
    $region11: #{tpu_custom_call.1} parent=1 // pred_check_branch
      %35 = sbr.rel (0) target = $region13
    $region12: #{tpu_custom_call.1} parent=1 // pred_region
      %36 = dma.done [#allocation4], 128
    $region13: #{tpu_custom_call.1} parent=1 // pred_fallthru
      _
    // Predicated region
    $region14: #{tpu_custom_call.1} parent=1 // pred_check
      _
    $region15: #{tpu_custom_call.1} parent=1 // pred_check_branch
      %38 = sbr.rel (0) target = $region17
    $region16: #{tpu_custom_call.1} parent=1 // pred_region
      %39 = dma.done [#allocation7], 1024
    $region17: #{tpu_custom_call.1} parent=1 // pred_fallthru
      _
    %p41 = scmp.eq.s32.totalorder 0, 0
    // Predicated region
    $region18: #{tpu_custom_call.1} parent=1 // pred_check
      %p42 = pneg %p41
    $region19: #{tpu_custom_call.1} parent=1 // pred_check_branch
      %44 = sbr.rel (%p42) target = $region21
    $region20: #{tpu_custom_call.1} parent=1 // pred_region
      %45 = vst [vmem:[#allocation2] sm:$0xff] 0.0
      %46 = vst [vmem:[#allocation2 + $0x8] sm:$0xff] 0.0
    $region21: #{tpu_custom_call.1} parent=1 // pred_fallthru
      _
    %v47 = vld [vmem:[#allocation2] sm:$0xff]
    %v48 = vld [vmem:[#allocation2 + $0x8] sm:$0xff]
    %v49 = vld [vmem:[#allocation3] sm:$0xf]
    %v50 = vld [vmem:[#allocation3 + $0x4] sm:$0xf]
    %v51 = vld [vmem:[#allocation6] sm:$0xf]
    %v52 = vld [vmem:[#allocation6 + $0x4] sm:$0xf]
    %v53 = vld [vmem:[#allocation6 + $0x8] sm:$0xf]
    %v54 = vld [vmem:[#allocation6 + $0xc] sm:$0xf]
    %v55 = vld [vmem:[#allocation6 + $0x10] sm:$0xf]
    %v56 = vld [vmem:[#allocation6 + $0x14] sm:$0xf]
    %v57 = vld [vmem:[#allocation6 + $0x18] sm:$0xf]
    %v58 = vld [vmem:[#allocation6 + $0x1c] sm:$0xf]
    %v59 = vld [vmem:[#allocation6 + $0x20] sm:$0xf]
    %v60 = vld [vmem:[#allocation6 + $0x24] sm:$0xf]
    %v61 = vld [vmem:[#allocation6 + $0x28] sm:$0xf]
    %v62 = vld [vmem:[#allocation6 + $0x2c] sm:$0xf]
    %v63 = vld [vmem:[#allocation6 + $0x30] sm:$0xf]
    %v64 = vld [vmem:[#allocation6 + $0x34] sm:$0xf]
    %v65 = vld [vmem:[#allocation6 + $0x38] sm:$0xf]
    %v66 = vld [vmem:[#allocation6 + $0x3c] sm:$0xf]
    %v69 = vunpack.c.l.b16 %v49
    %v70 = vunpack.c.l.b16 %v50
    %v71 = vpack.c.b16 %v70, %v69
    %v89 = vunpack.c.l.b16 %v51
    %v90 = vunpack.c.l.b16 %v52
    %v91 = vunpack.c.l.b16 %v53
    %v92 = vunpack.c.l.b16 %v54
    %v93 = vunpack.c.l.b16 %v55
    %v94 = vunpack.c.l.b16 %v56
    %v95 = vunpack.c.l.b16 %v57
    %v96 = vunpack.c.l.b16 %v58
    %v97 = vunpack.c.l.b16 %v59
    %v98 = vunpack.c.l.b16 %v60
    %v99 = vunpack.c.l.b16 %v61
    %v100 = vunpack.c.l.b16 %v62
    %v101 = vunpack.c.l.b16 %v63
    %v102 = vunpack.c.l.b16 %v64
    %v103 = vunpack.c.l.b16 %v65
    %v104 = vunpack.c.l.b16 %v66
    %v105 = vpack.c.b16 %v90, %v89
    %v106 = vpack.c.b16 %v92, %v91
    %v107 = vpack.c.b16 %v94, %v93
    %v108 = vpack.c.b16 %v96, %v95
    %v109 = vpack.c.b16 %v98, %v97
    %v110 = vpack.c.b16 %v100, %v99
    %v111 = vpack.c.b16 %v102, %v101
    %v112 = vpack.c.b16 %v104, %v103
    %121 = vmatprep.subr.bf16.mxu0 0
    %122 = vmatpush1.bf16.msra.mxu0 %v105
    %123 = vmatprep.subr.bf16.mxu0 0
    %124 = vmatpush1.bf16.msra.mxu0 %v106
    %125 = vmatprep.subr.bf16.mxu0 0
    %126 = vmatpush1.bf16.msra.mxu0 %v107
    %127 = vmatprep.subr.bf16.mxu0 0
    %128 = vmatpush1.bf16.msra.mxu0 %v108
    %129 = vmatprep.subr.bf16.mxu0 0
    %130 = vmatpush1.bf16.msra.mxu0 %v109
    %131 = vmatprep.subr.bf16.mxu0 0
    %132 = vmatpush1.bf16.msra.mxu0 %v110
    %133 = vmatprep.subr.bf16.mxu0 0
    %134 = vmatpush1.bf16.msra.mxu0 %v111
    %135 = vmatprep.subr.bf16.mxu0 0
    %136 = vmatpush1.bf16.msra.mxu0 %v112
    %137 = vmatprep.subr.bf16.mxu0 0
    %138 = vmatpush1.bf16.msra.mxu0 0
    %139 = vmatprep.subr.bf16.mxu0 0
    %140 = vmatpush1.bf16.msra.mxu0 0
    %141 = vmatprep.subr.bf16.mxu0 0
    %142 = vmatpush1.bf16.msra.mxu0 0
    %143 = vmatprep.subr.bf16.mxu0 0
    %144 = vmatpush1.bf16.msra.mxu0 0
    %145 = vmatprep.subr.bf16.mxu0 0
    %146 = vmatpush1.bf16.msra.mxu0 0
    %147 = vmatprep.subr.bf16.mxu0 0
    %148 = vmatpush1.bf16.msra.mxu0 0
    %149 = vmatprep.subr.bf16.mxu0 0
    %150 = vmatpush1.bf16.msra.mxu0 0
    %151 = vmatprep.subr.bf16.mxu0 0
    %152 = vmatpush1.bf16.msra.mxu0 0
    %153 = vmatprep.mubr.bf16.mxu0 0
    %154 = vmatmul.mubr.bf16.gmra.mrb[0].mxu0 %v71
    %v155 = vpop.f32.mrb[0].mxu0
    %v156 = vadd.f32 0.0, %v155
    %v157 = vpop.f32.mrb[0].mxu0
    %v158 = vpop.f32.mrb[0].mxu0
    %v159 = vadd.f32 0.0, %v158
    %v160 = vpop.f32.mrb[0].mxu0
    %161 = vdwg.mxu0
    %v162 = vadd.f32 %v47, %v156
    %v163 = vadd.f32 %v48, %v159
    %164 = vst [vmem:[#allocation2] sm:$0xff] %v162
    %165 = vst [vmem:[#allocation2 + $0x8] sm:$0xff] %v163
    // Predicated region
    $region22: #{tpu_custom_call.1} parent=1 // pred_check
      %p166 = pneg %p41
    $region23: #{tpu_custom_call.1} parent=1 // pred_check_branch
      %168 = sbr.rel (%p166) target = $region25
    $region24: #{tpu_custom_call.1} parent=1 // pred_region
      %v169 = vld [vmem:[#allocation2] sm:$0xff]
      %v170 = vld [vmem:[#allocation2 + $0x8] sm:$0xff]
      %171 = vst [vmem:[#allocation8] sm:$0xff] %v169
      %172 = vst [vmem:[#allocation8 + $0x8] sm:$0xff] %v170
    $region25: #{tpu_custom_call.1} parent=1 // pred_fallthru
      _
    // Predicated region
    $region26: #{tpu_custom_call.1} parent=1 // pred_check
      _
    $region27: #{tpu_custom_call.1} parent=1 // pred_check_branch
      %174 = sbr.rel (0) target = $region29
    $region28: #{tpu_custom_call.1} parent=1 // pred_region
      %s176 = ssub.s32 256, 256
      %177 = vsyncadd [#allocation5], %s176
      %s178 = sshll.u32 [#allocation8], 4
      %s179 = int_to_ptr.vmem [resolvable:$true] %s178
      %184 = dma.vmem_to_hbm [thread:$0]  %s179, 256, %s2, [#allocation5], 128, 128, 8
    $region29: #{tpu_custom_call.1} parent=1 // pred_fallthru
      _
    // Predicated region
    $region30: #{tpu_custom_call.1} parent=1 // pred_check
      _
    $region31: #{tpu_custom_call.1} parent=1 // pred_check_branch
      %186 = sbr.rel (0) target = $region33
    $region32: #{tpu_custom_call.1} parent=1 // pred_region
      %187 = dma.done [#allocation5], 256
    $region33: #{tpu_custom_call.1} parent=1 // pred_fallthru
      _
    %188 = vsyncpa [#allocation4], 1
    %189 = vsyncpa [#allocation7], 1
    %190 = vsyncpa [#allocation5], 1

</llo_original>
